<compile_context>
chip_gen: v6e
topology: v6e:2x2x1
jax: 0.10.0
libtpu: 0.0.40
codegen_flags: <defaults>
</compile_context>

<pallas_src>
import jax
import jax.numpy as jnp
from jax.experimental import pallas as pl
from jax.experimental.pallas import tpu as pltpu

EMB_DIM = 64       # embedding_dim (small test size; CFG uses 2048/768)
PROJ_DIM = 256     # CFG.projection_dim
BATCH = 8
LN_EPS = 1e-5      # nn.LayerNorm default eps
TM_MAX = 512       # row-tile target (multiple of 256: v6e/v7x MXU rows; 128 ok on v5e)


def _round_up(a, m):
    return (a + m - 1) // m * m


def _choose_tm(B):
    """Row-tile size for the batch grid."""
    if B > TM_MAX:
        # Large batch: big tiles to amortize the ~0.35us/grid-step overhead,
        # multiple of 256, and at least 2 grid steps so v7x's 2nd TC has work.
        return min(TM_MAX, _round_up(pl.cdiv(B, 2), 256))
    # Small batch: one (possibly ragged) tile covering the whole batch,
    # rounded to 16 rows for bf16 sublane packing.
    return _round_up(B, 16)


def project_kernel(x_ref, w1_ref, w2_ref, bgb_ref, o_ref):
    # packed per-feature params: rows = [b1, b2, gamma, beta]
    b1 = bgb_ref[0:1, :]
    b2 = bgb_ref[1:2, :]
    gamma = bgb_ref[2:3, :]
    beta = bgb_ref[3:4, :]

    # x arrives f32 (no wrapper-side cast / extra HBM pass); cast on-chip for
    # the bf16 MXU, accumulate in f32.
    x_bf = x_ref[...].astype(jnp.bfloat16)

    # projected = x @ W1 + b1
    projected = jnp.dot(x_bf, w1_ref[...],
                        preferred_element_type=jnp.float32) + b1

    # GELU: tanh approximation -> EUP slot (otherwise idle), overlaps with
    # MXU/DMA instead of a long erf polynomial on the VALU. ~1e-3 vs exact erf.
    h = jax.nn.gelu(projected, approximate=True)

    # fc: h @ W2 + b2  (cast h to bf16 for the MXU, f32 accumulate)
    y = jnp.dot(h.astype(jnp.bfloat16), w2_ref[...],
                preferred_element_type=jnp.float32) + b2

    # TODO(synk): dropout is identity in eval mode; training-mode dropout omitted.
    y = y + projected                      # residual from pre-GELU 'projected'

    # LayerNorm over last dim (per-row stats, f32)
    mean = jnp.mean(y, axis=-1, keepdims=True)
    var = jnp.mean(jnp.square(y - mean), axis=-1, keepdims=True)
    y = (y - mean) * jax.lax.rsqrt(var + LN_EPS)
    o_ref[...] = (y * gamma + beta).astype(o_ref.dtype)


def project_forward(x, w1, b1, w2, b2, gamma, beta, out_dtype=None):
    B, E = x.shape
    P = w1.shape[1]
    # Downstream bf16 consumers can pass out_dtype=jnp.bfloat16 to halve the
    # output HBM stream (mem-bound on v6e/v7x); default matches input (f32).
    out_dtype = x.dtype if out_dtype is None else out_dtype

    TM = _choose_tm(B)
    grid = (pl.cdiv(B, TM),)

    # Weights streamed as bf16 (one DMA each, VMEM-resident across grid steps).
    # No batch padding: Pallas handles the ragged last row block — LayerNorm
    # stats are strictly per-row, so overhang reads are don't-cares and
    # overhang writes are clipped.
    w1_bf = w1.astype(jnp.bfloat16)
    w2_bf = w2.astype(jnp.bfloat16)
    bgb = jnp.concatenate([b1, b2, gamma, beta], axis=0)  # (4, P) f32

    # NOTE: W1/W2/bgb could be single-buffered (pipeline_mode=pl.Buffered(1))
    # to save ~1 MiB VMEM; default double-buffering is well within budget at
    # TM=512 (~12 MiB total), so we keep the default for portability.
    out = pl.pallas_call(
        project_kernel,
        out_shape=jax.ShapeDtypeStruct((B, P), out_dtype),
        grid=grid,
        in_specs=[
            pl.BlockSpec((TM, E), lambda i: (i, 0)),   # x row tile (pipelined)
            pl.BlockSpec((E, P), lambda i: (0, 0)),    # W1: VMEM-resident
            pl.BlockSpec((P, P), lambda i: (0, 0)),    # W2: VMEM-resident
            pl.BlockSpec((4, P), lambda i: (0, 0)),    # packed b1/b2/gamma/beta
        ],
        out_specs=pl.BlockSpec((TM, P), lambda i: (i, 0)),
        compiler_params=pltpu.CompilerParams(
            dimension_semantics=("parallel",)),
    )(x, w1_bf, w2_bf, bgb)
    return out


def make_params(key, emb_dim, proj_dim):
    k1, k2, k3, k4 = jax.random.split(key, 4)
    # nn.Linear-style init (uniform +- 1/sqrt(fan_in)); deterministic via PRNGKey.
    lim1 = 1.0 / jnp.sqrt(emb_dim)
    w1 = jax.random.uniform(k1, (emb_dim, proj_dim), jnp.float32, -lim1, lim1)
    b1 = jax.random.uniform(k2, (1, proj_dim), jnp.float32, -lim1, lim1)
    lim2 = 1.0 / jnp.sqrt(proj_dim)
    w2 = jax.random.uniform(k3, (proj_dim, proj_dim), jnp.float32, -lim2, lim2)
    b2 = jax.random.uniform(k4, (1, proj_dim), jnp.float32, -lim2, lim2)
    gamma = jnp.ones((1, proj_dim), jnp.float32)
    beta = jnp.zeros((1, proj_dim), jnp.float32)
    return w1, b1, w2, b2, gamma, beta


if __name__ == "__main__":
    key = jax.random.PRNGKey(0)
    kx, kp = jax.random.split(key)
    x = jax.random.normal(kx, (BATCH, EMB_DIM), jnp.float32)
    w1, b1, w2, b2, gamma, beta = make_params(kp, EMB_DIM, PROJ_DIM)

    out = project_forward(x, w1, b1, w2, b2, gamma, beta)
    jax.block_until_ready(out)

    # Reference: PyTorch-default exact-erf GELU, bf16 MXU-matched matmul inputs
    # with f32 accumulation. Kernel uses the tanh GELU approximation (~1e-3
    # delta), well inside the 2e-2 tolerance already used for bf16 MXU inputs.
    xb = x.astype(jnp.bfloat16)
    proj_ref = jnp.dot(xb, w1.astype(jnp.bfloat16),
                       preferred_element_type=jnp.float32) + b1
    h_ref = jax.nn.gelu(proj_ref, approximate=False)
    y_ref = jnp.dot(h_ref.astype(jnp.bfloat16), w2.astype(jnp.bfloat16),
                    preferred_element_type=jnp.float32) + b2 + proj_ref
    mu = y_ref.mean(-1, keepdims=True)
    var = ((y_ref - mu) ** 2).mean(-1, keepdims=True)
    ref = (y_ref - mu) / jnp.sqrt(var + LN_EPS) * gamma + beta
    assert jnp.allclose(out, ref, atol=2e-2, rtol=2e-2), "mismatch vs reference"

    print("KERNEL_OK")
</pallas_src>

<mosaic_0001>
module attributes {stable_mosaic.version = 11 : i64} {
  func.func @project_kernel(%arg0: i32, %arg1: memref<16x64xf32, #tpu.memory_space<vmem>>, %arg2: memref<64x256xbf16, #tpu.memory_space<vmem>>, %arg3: memref<256x256xbf16, #tpu.memory_space<vmem>>, %arg4: memref<4x256xf32, #tpu.memory_space<vmem>>, %arg5: memref<16x256xf32, #tpu.memory_space<vmem>>) attributes {dimension_semantics = [#tpu.dimension_semantics<parallel>], iteration_bounds = array<i64: 1>, scalar_prefetch = 0 : i64, scratch_operands = 0 : i64, tpu.core_type = #tpu.core_type<tc>, window_params = [{transform_indices = @transform_0, window_bounds = array<i64: 16, 64>}, {pipeline_mode = #tpu.pipeline_mode<synchronous>, transform_indices = @transform_1, window_bounds = array<i64: 64, 256>}, {pipeline_mode = #tpu.pipeline_mode<synchronous>, transform_indices = @transform_2, window_bounds = array<i64: 256, 256>}, {pipeline_mode = #tpu.pipeline_mode<synchronous>, transform_indices = @transform_3, window_bounds = array<i64: 4, 256>}, {transform_indices = @transform_4, window_bounds = array<i64: 16, 256>}]} {
    %c0 = arith.constant 0 : index
    %c0_0 = arith.constant 0 : index
    %0 = vector.load %arg4[%c0, %c0_0] : memref<4x256xf32, #tpu.memory_space<vmem>>, vector<1x256xf32>
    %c1 = arith.constant 1 : index
    %c0_1 = arith.constant 0 : index
    %1 = vector.load %arg4[%c1, %c0_1] : memref<4x256xf32, #tpu.memory_space<vmem>>, vector<1x256xf32>
    %c2 = arith.constant 2 : index
    %c0_2 = arith.constant 0 : index
    %2 = vector.load %arg4[%c2, %c0_2] : memref<4x256xf32, #tpu.memory_space<vmem>>, vector<1x256xf32>
    %c3 = arith.constant 3 : index
    %c0_3 = arith.constant 0 : index
    %3 = vector.load %arg4[%c3, %c0_3] : memref<4x256xf32, #tpu.memory_space<vmem>>, vector<1x256xf32>
    %c0_4 = arith.constant 0 : index
    %c0_5 = arith.constant 0 : index
    %4 = vector.load %arg1[%c0_4, %c0_5] : memref<16x64xf32, #tpu.memory_space<vmem>>, vector<16x64xf32>
    %5 = arith.truncf %4 : vector<16x64xf32> to vector<16x64xbf16>
    %c0_6 = arith.constant 0 : index
    %c0_7 = arith.constant 0 : index
    %6 = vector.load %arg2[%c0_6, %c0_7] : memref<64x256xbf16, #tpu.memory_space<vmem>>, vector<64x256xbf16>
    %cst = arith.constant dense<0.000000e+00> : vector<16x256xf32>
    %7 = tpu.matmul %5, %6, %cst {dimension_numbers = #tpu.dot_dimension_numbers<[1], [0], [0], [1], [0, 0, 1, 1], [], []>} : vector<16x64xbf16>, vector<64x256xbf16>, vector<16x256xf32> -> vector<16x256xf32>
    %8 = vector.broadcast %0 : vector<1x256xf32> to vector<16x256xf32>
    %9 = arith.addf %7, %8 : vector<16x256xf32>
    %10 = arith.mulf %9, %9 : vector<16x256xf32>
    %11 = arith.mulf %9, %10 : vector<16x256xf32>
    %cst_8 = arith.constant 4.471500e-02 : f32
    %12 = vector.broadcast %cst_8 : f32 to vector<16x256xf32>
    %13 = arith.mulf %12, %11 : vector<16x256xf32>
    %14 = arith.addf %9, %13 : vector<16x256xf32>
    %cst_9 = arith.constant 0.797884583 : f32
    %15 = vector.broadcast %cst_9 : f32 to vector<16x256xf32>
    %16 = arith.mulf %15, %14 : vector<16x256xf32>
    %17 = math.tanh %16 : vector<16x256xf32>
    %cst_10 = arith.constant 1.000000e+00 : f32
    %18 = vector.broadcast %cst_10 : f32 to vector<16x256xf32>
    %19 = arith.addf %18, %17 : vector<16x256xf32>
    %cst_11 = arith.constant 5.000000e-01 : f32
    %20 = vector.broadcast %cst_11 : f32 to vector<16x256xf32>
    %21 = arith.mulf %20, %19 : vector<16x256xf32>
    %22 = arith.mulf %9, %21 : vector<16x256xf32>
    %23 = arith.truncf %22 : vector<16x256xf32> to vector<16x256xbf16>
    %c0_12 = arith.constant 0 : index
    %c0_13 = arith.constant 0 : index
    %24 = vector.load %arg3[%c0_12, %c0_13] : memref<256x256xbf16, #tpu.memory_space<vmem>>, vector<256x256xbf16>
    %cst_14 = arith.constant dense<0.000000e+00> : vector<16x256xf32>
    %25 = tpu.matmul %23, %24, %cst_14 {dimension_numbers = #tpu.dot_dimension_numbers<[1], [0], [0], [1], [0, 0, 1, 1], [], []>} : vector<16x256xbf16>, vector<256x256xbf16>, vector<16x256xf32> -> vector<16x256xf32>
    %26 = vector.broadcast %1 : vector<1x256xf32> to vector<16x256xf32>
    %27 = arith.addf %25, %26 : vector<16x256xf32>
    %28 = arith.addf %27, %9 : vector<16x256xf32>
    %cst_15 = arith.constant dense<0.000000e+00> : vector<16xf32>
    %29 = vector.multi_reduction <add>, %28, %cst_15 [1] : vector<16x256xf32> to vector<16xf32>
    %30 = vector.shape_cast %29 : vector<16xf32> to vector<16x1xf32>
    %cst_16 = arith.constant 2.560000e+02 : f32
    %31 = vector.broadcast %cst_16 : f32 to vector<16x1xf32>
    %32 = arith.divf %30, %31 : vector<16x1xf32>
    %33 = vector.broadcast %32 : vector<16x1xf32> to vector<16x256xf32>
    %34 = arith.subf %28, %33 : vector<16x256xf32>
    %35 = arith.mulf %34, %34 : vector<16x256xf32>
    %cst_17 = arith.constant dense<0.000000e+00> : vector<16xf32>
    %36 = vector.multi_reduction <add>, %35, %cst_17 [1] : vector<16x256xf32> to vector<16xf32>
    %37 = vector.shape_cast %36 : vector<16xf32> to vector<16x1xf32>
    %cst_18 = arith.constant 2.560000e+02 : f32
    %38 = vector.broadcast %cst_18 : f32 to vector<16x1xf32>
    %39 = arith.divf %37, %38 : vector<16x1xf32>
    %40 = vector.broadcast %32 : vector<16x1xf32> to vector<16x256xf32>
    %41 = arith.subf %28, %40 : vector<16x256xf32>
    %cst_19 = arith.constant 9.99999974E-6 : f32
    %42 = vector.broadcast %cst_19 : f32 to vector<16x1xf32>
    %43 = arith.addf %39, %42 : vector<16x1xf32>
    %44 = math.rsqrt %43 : vector<16x1xf32>
    %45 = vector.broadcast %44 : vector<16x1xf32> to vector<16x256xf32>
    %46 = arith.mulf %41, %45 : vector<16x256xf32>
    %47 = vector.broadcast %2 : vector<1x256xf32> to vector<16x256xf32>
    %48 = arith.mulf %46, %47 : vector<16x256xf32>
    %49 = vector.broadcast %3 : vector<1x256xf32> to vector<16x256xf32>
    %50 = arith.addf %48, %49 : vector<16x256xf32>
    %c0_20 = arith.constant 0 : index
    %c0_21 = arith.constant 0 : index
    %51 = vector.load %arg5[%c0_20, %c0_21] : memref<16x256xf32, #tpu.memory_space<vmem>>, vector<16x256xf32>
    tpu.vector_store %arg5[%c0_20, %c0_21], %50 {strides = array<i32>} : memref<16x256xf32, #tpu.memory_space<vmem>>, vector<16x256xf32>,
    return
  }
  func.func @transform_0(%arg0: i32) -> (i32, i32) {
    %c0_i32 = arith.constant 0 : i32
    %c0_i32_0 = arith.constant 0 : i32
    return %arg0, %c0_i32 : i32, i32
  }
  func.func @transform_1(%arg0: i32) -> (i32, i32) {
    %c0_i32 = arith.constant 0 : i32
    %c0_i32_0 = arith.constant 0 : i32
    %c0_i32_1 = arith.constant 0 : i32
    return %c0_i32, %c0_i32_0 : i32, i32
  }
  func.func @transform_2(%arg0: i32) -> (i32, i32) {
    %c0_i32 = arith.constant 0 : i32
    %c0_i32_0 = arith.constant 0 : i32
    %c0_i32_1 = arith.constant 0 : i32
    return %c0_i32, %c0_i32_0 : i32, i32
  }
  func.func @transform_3(%arg0: i32) -> (i32, i32) {
    %c0_i32 = arith.constant 0 : i32
    %c0_i32_0 = arith.constant 0 : i32
    %c0_i32_1 = arith.constant 0 : i32
    return %c0_i32, %c0_i32_0 : i32, i32
  }
  func.func @transform_4(%arg0: i32) -> (i32, i32) {
    %c0_i32 = arith.constant 0 : i32
    %c0_i32_0 = arith.constant 0 : i32
    return %arg0, %c0_i32 : i32, i32
  }
}

</mosaic_0001>

<llo_original>
// kernel: tpu_custom_call.1
$region0: #{tpu_custom_call.1}
  #allocation0 [shape = 'u32[]', space=smem, size = 0x4, offset = 0x4, fixed_abs, tag = 'smem constant byte address 0x4 - core index']
  #allocation1 [shape = 'u32[144,128]{1,0:T(1,128)}', space=vmem, size = 0x12000, scoped, tag = 'internal scratch']
  %s0 = inlined_call_operand.hbm [shape: f32[8,64], index: 0, kind: input, shape index: {}]
  %s1 = inlined_call_operand.hbm [shape: bf16[64,256], index: 1, kind: input, shape index: {}]
  %s2 = inlined_call_operand.hbm [shape: bf16[256,256], index: 2, kind: input, shape index: {}]
  %s3 = inlined_call_operand.hbm [shape: f32[4,256], index: 3, kind: input, shape index: {}]
  %s4 = inlined_call_operand.hbm [shape: f32[8,256], index: 4, kind: output, shape index: {}]
  %s5 = sld [smem:[#allocation0]]
  $region42: #{tpu_custom_call.1} parent=0
    _
  %s7 = ssub.s32 1, %s5
  %s8 = scalar_select 0, %s7, %s5
  $region1: #{tpu_custom_call.1} parent=0
    #allocation2 [shape = 'u8[8192]{0}', space=vmem, size = 0x2000, scoped, tag = 'input window, operand 0, single buffered']
    #allocation3 [shape = 's32[1]{0}', space=sflag, size = 0x4, scoped, tag = 'scoped memory for tpu_custom_call.1']
    #allocation4 [shape = 's32[1]{0}', space=sflag, size = 0x4, scoped, tag = 'scoped memory for tpu_custom_call.1']
    #allocation5 [shape = 'u8[32768]{0}', space=vmem, size = 0x8000, scoped, tag = 'input window, operand 1, single buffered']
    #allocation6 [shape = 's32[1]{0}', space=sflag, size = 0x4, scoped, tag = 'scoped memory for tpu_custom_call.1']
    #allocation7 [shape = 'u8[131072]{0}', space=vmem, size = 0x20000, scoped, tag = 'input window, operand 2, single buffered']
    #allocation8 [shape = 'u8[4096]{0}', space=vmem, size = 0x1000, scoped, tag = 'input window, operand 3, single buffered']
    #allocation9 [shape = 's32[1]{0}', space=sflag, size = 0x4, scoped, tag = 'scoped memory for tpu_custom_call.1']
    #allocation10 [shape = 'u8[16384]{0}', space=vmem, size = 0x4000, scoped, tag = 'output window, operand 0, single buffered']
    %9 = vsyncpa [#allocation3], 0
    %10 = vsyncpa [#allocation6], 0
    %11 = vsyncpa [#allocation9], 0
    %12 = vsyncpa [#allocation4], 0
    // Predicated region
    $region2: #{tpu_custom_call.1} parent=1 // pred_check
      _
    $region3: #{tpu_custom_call.1} parent=1 // pred_check_branch
      %14 = sbr.rel (0) target = $region5
    $region4: #{tpu_custom_call.1} parent=1 // pred_region
      %s16 = ssub.s32 256, 128
      %17 = vsyncadd [#allocation3], %s16
      %s18 = sshll.u32 [#allocation2], 4
      %s19 = int_to_ptr.vmem [resolvable:$true] %s18
      %24 = dma.hbm_to_vmem [thread:$0]  %s0, 128, %s19, [#allocation3], 128, 128, 8
    $region5: #{tpu_custom_call.1} parent=1 // pred_fallthru
      _
    // Predicated region
    $region6: #{tpu_custom_call.1} parent=1 // pred_check
      _
    $region7: #{tpu_custom_call.1} parent=1 // pred_check_branch
      %26 = sbr.rel (0) target = $region9
    $region8: #{tpu_custom_call.1} parent=1 // pred_region
      %s28 = ssub.s32 1024, 1024
      %29 = vsyncadd [#allocation6], %s28
      %s30 = sshll.u32 [#allocation5], 4
      %s31 = int_to_ptr.vmem [resolvable:$true] %s30
      %36 = dma.hbm_to_vmem [thread:$0]  %s1, 1024, %s31, [#allocation6], 128, 128, 8
    $region9: #{tpu_custom_call.1} parent=1 // pred_fallthru
      _
    // Predicated region
    $region10: #{tpu_custom_call.1} parent=1 // pred_check
      _
    $region11: #{tpu_custom_call.1} parent=1 // pred_check_branch
      %38 = sbr.rel (0) target = $region13
    $region12: #{tpu_custom_call.1} parent=1 // pred_region
      %s40 = ssub.s32 4096, 4096
      %41 = vsyncadd [#allocation6], %s40
      %s42 = sshll.u32 [#allocation7], 4
      %s43 = int_to_ptr.vmem [resolvable:$true] %s42
      %48 = dma.hbm_to_vmem [thread:$0]  %s2, 4096, %s43, [#allocation6], 128, 128, 8
    $region13: #{tpu_custom_call.1} parent=1 // pred_fallthru
      _
    // Predicated region
    $region14: #{tpu_custom_call.1} parent=1 // pred_check
      _
    $region15: #{tpu_custom_call.1} parent=1 // pred_check_branch
      %50 = sbr.rel (0) target = $region17
    $region16: #{tpu_custom_call.1} parent=1 // pred_region
      %s52 = ssub.s32 128, 128
      %53 = vsyncadd [#allocation9], %s52
      %s55 = sshll.u32 [#allocation8], 4
      %s56 = int_to_ptr.vmem [resolvable:$true] %s55
      %58 = dma.hbm_to_vmem [thread:$0]  %s3, 128, %s56, [#allocation9]
    $region17: #{tpu_custom_call.1} parent=1 // pred_fallthru
      _
    // Predicated region
    $region18: #{tpu_custom_call.1} parent=1 // pred_check
      _
    $region19: #{tpu_custom_call.1} parent=1 // pred_check_branch
      %60 = sbr.rel (0) target = $region21
    $region20: #{tpu_custom_call.1} parent=1 // pred_region
      %61 = dma.done [#allocation3], 256
    $region21: #{tpu_custom_call.1} parent=1 // pred_fallthru
      _
    // Predicated region
    $region22: #{tpu_custom_call.1} parent=1 // pred_check
      _
    $region23: #{tpu_custom_call.1} parent=1 // pred_check_branch
      %63 = sbr.rel (0) target = $region25
    $region24: #{tpu_custom_call.1} parent=1 // pred_region
      %64 = dma.done [#allocation6], 1024
    $region25: #{tpu_custom_call.1} parent=1 // pred_fallthru
      _
    // Predicated region
    $region26: #{tpu_custom_call.1} parent=1 // pred_check
      _
    $region27: #{tpu_custom_call.1} parent=1 // pred_check_branch
      %66 = sbr.rel (0) target = $region29
    $region28: #{tpu_custom_call.1} parent=1 // pred_region
      %67 = dma.done [#allocation6], 4096
    $region29: #{tpu_custom_call.1} parent=1 // pred_fallthru
      _
    // Predicated region
    $region30: #{tpu_custom_call.1} parent=1 // pred_check
      _
    $region31: #{tpu_custom_call.1} parent=1 // pred_check_branch
      %69 = sbr.rel (0) target = $region33
    $region32: #{tpu_custom_call.1} parent=1 // pred_region
      %70 = dma.done [#allocation9], 128
    $region33: #{tpu_custom_call.1} parent=1 // pred_fallthru
      _
    %v72 = vld [vmem:[#allocation8] ss:$4 sm:$0x3]
    %s73 = scalar_lea.vmem [#allocation8], 1
    %v74 = vld [vmem:[%s73] ss:$4 sm:$0x3]
    %s75 = scalar_lea.vmem [#allocation8], 2
    %v76 = vld [vmem:[%s75] ss:$4 sm:$0x3]
    %s77 = scalar_lea.vmem [#allocation8], 3
    %v78 = vld [vmem:[%s77] ss:$4 sm:$0x3]
    %v79 = vld [vmem:[#allocation2] sm:$0xff]
    %v80 = vld [vmem:[#allocation2 + $0x8] sm:$0xff]
    %v81 = vpack.c.bf16 %v80, %v79
    %v82 = vld [vmem:[#allocation5] sm:$0xff]
    %v83 = vld [vmem:[#allocation5 + $0x8] sm:$0xff]
    %v84 = vld [vmem:[#allocation5 + $0x10] sm:$0xff]
    %v85 = vld [vmem:[#allocation5 + $0x18] sm:$0xff]
    %v86 = vld [vmem:[#allocation5 + $0x20] sm:$0xff]
    %v87 = vld [vmem:[#allocation5 + $0x28] sm:$0xff]
    %v88 = vld [vmem:[#allocation5 + $0x30] sm:$0xff]
    %v89 = vld [vmem:[#allocation5 + $0x38] sm:$0xff]
    %v91 = vlaneseq
    %v92 = vshrl.u32 %v91, 7
    %v93 = vsub.s32 0, %v92
    %v94 = vrot.slane %v72, %v93
    %v95 = vlaneseq
    %v96 = vshrl.u32 %v95, 7
    %v97 = vsub.s32 1, %v96
    %v98 = vrot.slane %v72, %v97
    %v109 = vunpack.c.l.b16 %v82
    %v110 = vunpack.c.h.b16 %v82
    %v111 = vunpack.c.l.b16 %v83
    %v112 = vunpack.c.h.b16 %v83
    %v113 = vunpack.c.l.b16 %v84
    %v114 = vunpack.c.h.b16 %v84
    %v115 = vunpack.c.l.b16 %v85
    %v116 = vunpack.c.h.b16 %v85
    %v117 = vunpack.c.l.b16 %v86
    %v118 = vunpack.c.h.b16 %v86
    %v119 = vunpack.c.l.b16 %v87
    %v120 = vunpack.c.h.b16 %v87
    %v121 = vunpack.c.l.b16 %v88
    %v122 = vunpack.c.h.b16 %v88
    %v123 = vunpack.c.l.b16 %v89
    %v124 = vunpack.c.h.b16 %v89
    %v125 = vpack.c.b16 %v111, %v109
    %v126 = vpack.c.b16 %v112, %v110
    %v127 = vpack.c.b16 %v115, %v113
    %v128 = vpack.c.b16 %v116, %v114
    %v129 = vpack.c.b16 %v119, %v117
    %v130 = vpack.c.b16 %v120, %v118
    %v131 = vpack.c.b16 %v123, %v121
    %v132 = vpack.c.b16 %v124, %v122
    %vm141 = vcmask 523264
    %v143 = vsel %vm141, %v81, 0
    %145 = vmatprep.subr.bf16.mxu0 0
    %146 = vmatpush1.bf16.msra.mxu0 0
    %147 = vmatprep.subr.bf16.mxu0 0
    %148 = vmatpush1.bf16.msra.mxu0 0
    %149 = vmatprep.subr.bf16.mxu0 0
    %150 = vmatpush1.bf16.msra.mxu0 0
    %151 = vmatprep.subr.bf16.mxu0 0
    %152 = vmatpush1.bf16.msra.mxu0 0
    %153 = vmatprep.subr.bf16.mxu0 %v132
    %154 = vmatpush1.bf16.msra.mxu0 %v131
    %155 = vmatprep.subr.bf16.mxu0 %v130
    %156 = vmatpush1.bf16.msra.mxu0 %v129
    %157 = vmatprep.subr.bf16.mxu0 %v128
    %158 = vmatpush1.bf16.msra.mxu0 %v127
    %159 = vmatprep.subr.bf16.mxu0 %v126
    %160 = vmatpush1.bf16.msra.mxu0 %v125
    %161 = vmatprep.subr.bf16.mxu0 0
    %162 = vmatpush2.bf16.msra.mxu0 0
    %163 = vmatprep.subr.bf16.mxu0 0
    %164 = vmatpush2.bf16.msra.mxu0 0
    %165 = vmatprep.subr.bf16.mxu0 0
    %166 = vmatpush2.bf16.msra.mxu0 0
    %167 = vmatprep.subr.bf16.mxu0 0
    %168 = vmatpush2.bf16.msra.mxu0 0
    %169 = vmatprep.subr.bf16.mxu0 0
    %170 = vmatpush2.bf16.msra.mxu0 0
    %171 = vmatprep.subr.bf16.mxu0 0
    %172 = vmatpush2.bf16.msra.mxu0 0
    %173 = vmatprep.subr.bf16.mxu0 0
    %174 = vmatpush2.bf16.msra.mxu0 0
    %175 = vmatprep.subr.bf16.mxu0 0
    %176 = vmatpush2.bf16.msra.mxu0 0
    %177 = vmatprep.mubr.bf16.mxu0 0
    %178 = vmatmul.mubr.bf16.gmra.mxu0 %v143
    %v179 = vpop.f32.mrf.mxu0
    %v180 = vadd.f32 %v94, %v179
    %v181 = vpop.f32.mrf.mxu0
    %v182 = vadd.f32 %v98, %v181
    %v183 = vpop.f32.mrf.mxu0
    %v184 = vadd.f32 %v94, %v183
    %v185 = vpop.f32.mrf.mxu0
    %v186 = vadd.f32 %v98, %v185
    %187 = vdwg.mxu0
    %v188 = vmul.f32 %v180, %v180
    %v189 = vmul.f32 %v182, %v182
    %v190 = vmul.f32 %v184, %v184
    %v191 = vmul.f32 %v186, %v186
    %v192 = vmul.f32 %v180, %v188
    %v193 = vmul.f32 %v182, %v189
    %v194 = vmul.f32 %v184, %v190
    %v195 = vmul.f32 %v186, %v191
    %v196 = vmul.f32 %v192, 0.044715
    %v197 = vmul.f32 %v193, 0.044715
    %v198 = vmul.f32 %v194, 0.044715
    %v199 = vmul.f32 %v195, 0.044715
    %v200 = vadd.f32 %v180, %v196
    %v201 = vadd.f32 %v182, %v197
    %v202 = vadd.f32 %v184, %v198
    %v203 = vadd.f32 %v186, %v199
    %v204 = vmul.f32 %v200, 0.7978846
    %v205 = vmul.f32 %v201, 0.7978846
    %v206 = vmul.f32 %v202, 0.7978846
    %v207 = vmul.f32 %v203, 0.7978846
    %v208 = vtanh.pop %v204
    %v209 = vtanh.pop %v205
    %v210 = vtanh.pop %v206
    %v211 = vtanh.pop %v207
    %v212 = vadd.f32 %v208, 1.0
    %v213 = vadd.f32 %v209, 1.0
    %v214 = vadd.f32 %v210, 1.0
    %v215 = vadd.f32 %v211, 1.0
    %v216 = vmul.f32 %v212, 0.5
    %v217 = vmul.f32 %v213, 0.5
    %v218 = vmul.f32 %v214, 0.5
    %v219 = vmul.f32 %v215, 0.5
    %v220 = vmul.f32 %v180, %v216
    %v221 = vmul.f32 %v182, %v217
    %v222 = vmul.f32 %v184, %v218
    %v223 = vmul.f32 %v186, %v219
    %v224 = vpack.c.bf16 %v222, %v220
    %v225 = vpack.c.bf16 %v223, %v221
    %v226 = vld [vmem:[#allocation7] sm:$0xff]
    %v227 = vld [vmem:[#allocation7 + $0x8] sm:$0xff]
    %v228 = vld [vmem:[#allocation7 + $0x10] sm:$0xff]
    %v229 = vld [vmem:[#allocation7 + $0x18] sm:$0xff]
    %v230 = vld [vmem:[#allocation7 + $0x20] sm:$0xff]
    %v231 = vld [vmem:[#allocation7 + $0x28] sm:$0xff]
    %v232 = vld [vmem:[#allocation7 + $0x30] sm:$0xff]
    %v233 = vld [vmem:[#allocation7 + $0x38] sm:$0xff]
    %v234 = vld [vmem:[#allocation7 + $0x40] sm:$0xff]
    %v235 = vld [vmem:[#allocation7 + $0x48] sm:$0xff]
    %v236 = vld [vmem:[#allocation7 + $0x50] sm:$0xff]
    %v237 = vld [vmem:[#allocation7 + $0x58] sm:$0xff]
    %v238 = vld [vmem:[#allocation7 + $0x60] sm:$0xff]
    %v239 = vld [vmem:[#allocation7 + $0x68] sm:$0xff]
    %v240 = vld [vmem:[#allocation7 + $0x70] sm:$0xff]
    %v241 = vld [vmem:[#allocation7 + $0x78] sm:$0xff]
    %v242 = vld [vmem:[#allocation7 + $0x80] sm:$0xff]
    %v243 = vld [vmem:[#allocation7 + $0x88] sm:$0xff]
    %v244 = vld [vmem:[#allocation7 + $0x90] sm:$0xff]
    %v245 = vld [vmem:[#allocation7 + $0x98] sm:$0xff]
    %v246 = vld [vmem:[#allocation7 + $0xa0] sm:$0xff]
    %v247 = vld [vmem:[#allocation7 + $0xa8] sm:$0xff]
    %v248 = vld [vmem:[#allocation7 + $0xb0] sm:$0xff]
    %v249 = vld [vmem:[#allocation7 + $0xb8] sm:$0xff]
    %v250 = vld [vmem:[#allocation7 + $0xc0] sm:$0xff]
    %v251 = vld [vmem:[#allocation7 + $0xc8] sm:$0xff]
    %v252 = vld [vmem:[#allocation7 + $0xd0] sm:$0xff]
    %v253 = vld [vmem:[#allocation7 + $0xd8] sm:$0xff]
    %v254 = vld [vmem:[#allocation7 + $0xe0] sm:$0xff]
    %v255 = vld [vmem:[#allocation7 + $0xe8] sm:$0xff]
    %v256 = vld [vmem:[#allocation7 + $0xf0] sm:$0xff]
    %v257 = vld [vmem:[#allocation7 + $0xf8] sm:$0xff]
    %v259 = vlaneseq
    %v260 = vshrl.u32 %v259, 7
    %v261 = vsub.s32 0, %v260
    %v262 = vrot.slane %v74, %v261
    %v263 = vlaneseq
    %v264 = vshrl.u32 %v263, 7
    %v265 = vsub.s32 1, %v264
    %v266 = vrot.slane %v74, %v265
    %v301 = vunpack.c.l.b16 %v226
    %v302 = vunpack.c.h.b16 %v226
    %v303 = vunpack.c.l.b16 %v227
    %v304 = vunpack.c.h.b16 %v227
    %v305 = vunpack.c.l.b16 %v228
    %v306 = vunpack.c.h.b16 %v228
    %v307 = vunpack.c.l.b16 %v229
    %v308 = vunpack.c.h.b16 %v229
    %v309 = vunpack.c.l.b16 %v230
    %v310 = vunpack.c.h.b16 %v230
    %v311 = vunpack.c.l.b16 %v231
    %v312 = vunpack.c.h.b16 %v231
    %v313 = vunpack.c.l.b16 %v232
    %v314 = vunpack.c.h.b16 %v232
    %v315 = vunpack.c.l.b16 %v233
    %v316 = vunpack.c.h.b16 %v233
    %v317 = vunpack.c.l.b16 %v234
    %v318 = vunpack.c.h.b16 %v234
    %v319 = vunpack.c.l.b16 %v235
    %v320 = vunpack.c.h.b16 %v235
    %v321 = vunpack.c.l.b16 %v236
    %v322 = vunpack.c.h.b16 %v236
    %v323 = vunpack.c.l.b16 %v237
    %v324 = vunpack.c.h.b16 %v237
    %v325 = vunpack.c.l.b16 %v238
    %v326 = vunpack.c.h.b16 %v238
    %v327 = vunpack.c.l.b16 %v239
    %v328 = vunpack.c.h.b16 %v239
    %v329 = vunpack.c.l.b16 %v240
    %v330 = vunpack.c.h.b16 %v240
    %v331 = vunpack.c.l.b16 %v241
    %v332 = vunpack.c.h.b16 %v241
    %v333 = vunpack.c.l.b16 %v242
    %v334 = vunpack.c.h.b16 %v242
    %v335 = vunpack.c.l.b16 %v243
    %v336 = vunpack.c.h.b16 %v243
    %v337 = vunpack.c.l.b16 %v244
    %v338 = vunpack.c.h.b16 %v244
    %v339 = vunpack.c.l.b16 %v245
    %v340 = vunpack.c.h.b16 %v245
    %v341 = vunpack.c.l.b16 %v246
    %v342 = vunpack.c.h.b16 %v246
    %v343 = vunpack.c.l.b16 %v247
    %v344 = vunpack.c.h.b16 %v247
    %v345 = vunpack.c.l.b16 %v248
    %v346 = vunpack.c.h.b16 %v248
    %v347 = vunpack.c.l.b16 %v249
    %v348 = vunpack.c.h.b16 %v249
    %v349 = vunpack.c.l.b16 %v250
    %v350 = vunpack.c.h.b16 %v250
    %v351 = vunpack.c.l.b16 %v251
    %v352 = vunpack.c.h.b16 %v251
    %v353 = vunpack.c.l.b16 %v252
    %v354 = vunpack.c.h.b16 %v252
    %v355 = vunpack.c.l.b16 %v253
    %v356 = vunpack.c.h.b16 %v253
    %v357 = vunpack.c.l.b16 %v254
    %v358 = vunpack.c.h.b16 %v254
    %v359 = vunpack.c.l.b16 %v255
    %v360 = vunpack.c.h.b16 %v255
    %v361 = vunpack.c.l.b16 %v256
    %v362 = vunpack.c.h.b16 %v256
    %v363 = vunpack.c.l.b16 %v257
    %v364 = vunpack.c.h.b16 %v257
    %v365 = vpack.c.b16 %v303, %v301
    %v366 = vpack.c.b16 %v304, %v302
    %v367 = vpack.c.b16 %v307, %v305
    %v368 = vpack.c.b16 %v308, %v306
    %v369 = vpack.c.b16 %v311, %v309
    %v370 = vpack.c.b16 %v312, %v310
    %v371 = vpack.c.b16 %v315, %v313
    %v372 = vpack.c.b16 %v316, %v314
    %v373 = vpack.c.b16 %v319, %v317
    %v374 = vpack.c.b16 %v320, %v318
    %v375 = vpack.c.b16 %v323, %v321
    %v376 = vpack.c.b16 %v324, %v322
    %v377 = vpack.c.b16 %v327, %v325
    %v378 = vpack.c.b16 %v328, %v326
    %v379 = vpack.c.b16 %v331, %v329
    %v380 = vpack.c.b16 %v332, %v330
    %v381 = vpack.c.b16 %v335, %v333
    %v382 = vpack.c.b16 %v336, %v334
    %v383 = vpack.c.b16 %v339, %v337
    %v384 = vpack.c.b16 %v340, %v338
    %v385 = vpack.c.b16 %v343, %v341
    %v386 = vpack.c.b16 %v344, %v342
    %v387 = vpack.c.b16 %v347, %v345
    %v388 = vpack.c.b16 %v348, %v346
    %v389 = vpack.c.b16 %v351, %v349
    %v390 = vpack.c.b16 %v352, %v350
    %v391 = vpack.c.b16 %v355, %v353
    %v392 = vpack.c.b16 %v356, %v354
    %v393 = vpack.c.b16 %v359, %v357
    %v394 = vpack.c.b16 %v360, %v358
    %v395 = vpack.c.b16 %v363, %v361
    %v396 = vpack.c.b16 %v364, %v362
    %429 = vmatprep.subr.bf16.mxu0 %v380
    %430 = vmatpush1.bf16.msra.mxu0 %v379
    %431 = vmatprep.subr.bf16.mxu0 %v378
    %432 = vmatpush1.bf16.msra.mxu0 %v377
    %433 = vmatprep.subr.bf16.mxu0 %v376
    %434 = vmatpush1.bf16.msra.mxu0 %v375
    %435 = vmatprep.subr.bf16.mxu0 %v374
    %436 = vmatpush1.bf16.msra.mxu0 %v373
    %437 = vmatprep.subr.bf16.mxu0 %v372
    %438 = vmatpush1.bf16.msra.mxu0 %v371
    %439 = vmatprep.subr.bf16.mxu0 %v370
    %440 = vmatpush1.bf16.msra.mxu0 %v369
    %441 = vmatprep.subr.bf16.mxu0 %v368
    %442 = vmatpush1.bf16.msra.mxu0 %v367
    %443 = vmatprep.subr.bf16.mxu0 %v366
    %444 = vmatpush1.bf16.msra.mxu0 %v365
    %445 = vmatprep.subr.bf16.mxu0 %v396
    %446 = vmatpush2.bf16.msra.mxu0 %v395
    %447 = vmatprep.subr.bf16.mxu0 %v394
    %448 = vmatpush2.bf16.msra.mxu0 %v393
    %449 = vmatprep.subr.bf16.mxu0 %v392
    %450 = vmatpush2.bf16.msra.mxu0 %v391
    %451 = vmatprep.subr.bf16.mxu0 %v390
    %452 = vmatpush2.bf16.msra.mxu0 %v389
    %453 = vmatprep.subr.bf16.mxu0 %v388
    %454 = vmatpush2.bf16.msra.mxu0 %v387
    %455 = vmatprep.subr.bf16.mxu0 %v386
    %456 = vmatpush2.bf16.msra.mxu0 %v385
    %457 = vmatprep.subr.bf16.mxu0 %v384
    %458 = vmatpush2.bf16.msra.mxu0 %v383
    %459 = vmatprep.subr.bf16.mxu0 %v382
    %460 = vmatpush2.bf16.msra.mxu0 %v381
    %461 = vmatprep.mubr.bf16.mxu0 %v225
    %462 = vmatmul.mubr.bf16.gmra.mxu0 %v224
    %v463 = vpop.f32.mrf.mxu0
    %v464 = vadd.f32 %v262, %v463
    %v465 = vpop.f32.mrf.mxu0
    %v466 = vadd.f32 %v266, %v465
    %v467 = vpop.f32.mrf.mxu0
    %v468 = vadd.f32 %v262, %v467
    %v469 = vpop.f32.mrf.mxu0
    %v470 = vadd.f32 %v266, %v469
    %471 = vdwg.mxu0
    %v472 = vadd.f32 %v464, %v180
    %v473 = vadd.f32 %v466, %v182
    %v474 = vadd.f32 %v468, %v184
    %v475 = vadd.f32 %v470, %v186
    %v476 = vadd.f32 %v472, %v473
    %477 = vadd.xlane.f32.xlu0 %v476
    %v478 = vpop.xlane.xlu0 %477
    %v479 = vadd.f32 %v474, %v475
    %480 = vadd.xlane.f32.xlu0 %v479
    %v481 = vpop.xlane.xlu0 %480
    %v482 = vrcp.pop 256.0
    %v483 = vmul.f32 %v478, %v482
    %v484 = vmul.f32 %v481, %v482
    %v485 = vsub.f32 %v472, %v483
    %v486 = vsub.f32 %v473, %v483
    %v487 = vsub.f32 %v474, %v484
    %v488 = vsub.f32 %v475, %v484
    %v489 = vmul.f32 %v485, %v485
    %v490 = vmul.f32 %v486, %v486
    %v491 = vmul.f32 %v487, %v487
    %v492 = vmul.f32 %v488, %v488
    %v493 = vadd.f32 %v489, %v490
    %494 = vadd.xlane.f32.xlu0 %v493
    %v495 = vpop.xlane.xlu0 %494
    %v496 = vadd.f32 %v491, %v492
    %497 = vadd.xlane.f32.xlu0 %v496
    %v498 = vpop.xlane.xlu0 %497
    %v499 = vmul.f32 %v495, %v482
    %v500 = vmul.f32 %v498, %v482
    %v501 = vadd.f32 %v499, 1e-05
    %v502 = vadd.f32 %v500, 1e-05
    %v503 = vrsqrt.pop %v501
    %v504 = vrsqrt.pop %v502
    %v505 = vmul.f32 %v485, %v503
    %v506 = vmul.f32 %v486, %v503
    %v507 = vmul.f32 %v487, %v504
    %v508 = vmul.f32 %v488, %v504
    %v510 = vlaneseq
    %v511 = vshrl.u32 %v510, 7
    %v512 = vsub.s32 0, %v511
    %v513 = vrot.slane %v76, %v512
    %v514 = vlaneseq
    %v515 = vshrl.u32 %v514, 7
    %v516 = vsub.s32 1, %v515
    %v517 = vrot.slane %v76, %v516
    %v520 = vmul.f32 %v505, %v513
    %v521 = vmul.f32 %v506, %v517
    %v522 = vmul.f32 %v507, %v513
    %v523 = vmul.f32 %v508, %v517
    %v525 = vlaneseq
    %v526 = vshrl.u32 %v525, 7
    %v527 = vsub.s32 0, %v526
    %v528 = vrot.slane %v78, %v527
    %v529 = vlaneseq
    %v530 = vshrl.u32 %v529, 7
    %v531 = vsub.s32 1, %v530
    %v532 = vrot.slane %v78, %v531
    %v535 = vadd.f32 %v520, %v528
    %v536 = vadd.f32 %v521, %v532
    %v537 = vadd.f32 %v522, %v528
    %v538 = vadd.f32 %v523, %v532
    %539 = vst [vmem:[#allocation10] sm:$0xff] %v535
    %540 = vst [vmem:[#allocation10 + $0x8] sm:$0xff] %v536
    %541 = vst [vmem:[#allocation10 + $0x10] sm:$0xff] %v537
    %542 = vst [vmem:[#allocation10 + $0x18] sm:$0xff] %v538
    // Predicated region
    $region34: #{tpu_custom_call.1} parent=1 // pred_check
      _
    $region35: #{tpu_custom_call.1} parent=1 // pred_check_branch
      %544 = sbr.rel (0) target = $region37
    $region36: #{tpu_custom_call.1} parent=1 // pred_region
      %s546 = ssub.s32 512, 256
      %547 = vsyncadd [#allocation4], %s546
      %s548 = sshll.u32 [#allocation10], 4
      %s549 = int_to_ptr.vmem [resolvable:$true] %s548
      %554 = dma.vmem_to_hbm [thread:$0]  %s549, 256, %s4, [#allocation4], 256, 256, 16
    $region37: #{tpu_custom_call.1} parent=1 // pred_fallthru
      _
    // Predicated region
    $region38: #{tpu_custom_call.1} parent=1 // pred_check
      _
    $region39: #{tpu_custom_call.1} parent=1 // pred_check_branch
      %556 = sbr.rel (0) target = $region41
    $region40: #{tpu_custom_call.1} parent=1 // pred_region
      %557 = dma.done [#allocation4], 512
    $region41: #{tpu_custom_call.1} parent=1 // pred_fallthru
      _
    %558 = vsyncpa [#allocation3], 1
    %559 = vsyncpa [#allocation6], 1
    %560 = vsyncpa [#allocation9], 1
    %561 = vsyncpa [#allocation4], 1

</llo_original>
